<compile_context>
chip_gen: v7x
topology: tpu7x:2x2x1
jax: 0.10.0
libtpu: 0.0.40
codegen_flags: <defaults>
</compile_context>

<pallas_src>
import jax
import jax.numpy as jnp
from jax import lax
from jax.experimental import pallas as pl
from jax.experimental.pallas import tpu as pltpu


# ----------------------------------------------------------------------------
# Shared helper: softmax over dim=0 (batch axis), matching torch.softmax(x, dim=0)
# ----------------------------------------------------------------------------
def _dim0_softmax(logits):
    m = jnp.max(logits, axis=0, keepdims=True)
    e = jnp.exp(logits - m)
    denom = jnp.sum(e, axis=0, keepdims=True)
    # EUP approx reciprocal (free slot) + one Newton-Raphson step for ~2^-24 rel error.
    r = pl.reciprocal(denom, approx=True)
    r = r * (2.0 - denom * r)
    return e * r


# ----------------------------------------------------------------------------
# Kernel 1: linear + softmax(dim=0)  — inference path (y is None)
# NOTE: nn.Linear's bias is intentionally omitted — a per-column constant cancels
# exactly in softmax over dim=0, so the output is mathematically unchanged.
# ----------------------------------------------------------------------------
def linear_softmax_kernel(x_ref, w_ref, o_ref):
    # x_ref: (B, D)  w_ref: (D, C)  o_ref: (B, C)
    logits = jnp.dot(x_ref[...], w_ref[...], preferred_element_type=jnp.float32)
    o_ref[...] = _dim0_softmax(logits).astype(o_ref.dtype)


# ----------------------------------------------------------------------------
# Kernel 2 (fused): linear + softmax(dim=0) + CrossEntropyLoss, emitting BOTH
# y_pred (VMEM) and the scalar loss (SMEM) from a single launch.
# ----------------------------------------------------------------------------
def fused_kernel(x_ref, w_ref, y_ref, ypred_ref, loss_ref):
    B = x_ref.shape[0]
    C = w_ref.shape[1]
    logits = jnp.dot(x_ref[...], w_ref[...], preferred_element_type=jnp.float32)
    p = _dim0_softmax(logits)                                   # (B, C)
    ypred_ref[...] = p.astype(ypred_ref.dtype)

    # PyTorch CrossEntropyLoss on p: log_softmax over dim=1 + mean NLL.
    # (p is already a probability distribution over dim=0 — this "double softmax"
    #  is intentional and matches the original module; do not "fix" it.)
    # p ∈ (0,1] ⇒ logsumexp over dim=1 needs no max-subtraction for stability.
    lse = jnp.log(jnp.sum(jnp.exp(p), axis=1, keepdims=True))   # (B, 1)
    cls = lax.broadcasted_iota(jnp.int32, (B, C), 1)
    mask = (cls == y_ref[...]).astype(jnp.float32)              # y_ref: (B, 1) int32
    p_target = jnp.sum(mask * p, axis=1, keepdims=True)         # (B, 1) gathered prob
    nll = lse - p_target                                        # -(p_target - lse)
    loss_ref[0, 0] = jnp.sum(nll) * (1.0 / B)


# ----------------------------------------------------------------------------
# Wrappers replicating TorchModel.forward
# ----------------------------------------------------------------------------
_VMEM = pltpu.MemorySpace.VMEM
_SMEM = pltpu.MemorySpace.SMEM


def torch_model_forward_fused(x, w, y_labels):
    """Single pallas_call returning (y_pred (B,C), scalar loss).

    y_labels should be kernel-ready (B,1) int32; (B,) int is also accepted.
    """
    B, _ = x.shape
    C = w.shape[1]
    if y_labels.ndim == 1:
        y_labels = y_labels.reshape(B, 1)
    if y_labels.dtype != jnp.int32:
        y_labels = y_labels.astype(jnp.int32)
    y_pred, loss = pl.pallas_call(
        fused_kernel,
        out_shape=(
            jax.ShapeDtypeStruct((B, C), jnp.float32),
            jax.ShapeDtypeStruct((1, 1), jnp.float32),
        ),
        in_specs=[
            pl.BlockSpec(memory_space=_VMEM),
            pl.BlockSpec(memory_space=_VMEM),
            pl.BlockSpec(memory_space=_VMEM),
        ],
        out_specs=(
            pl.BlockSpec(memory_space=_VMEM),
            pl.BlockSpec(memory_space=_SMEM),
        ),
    )(x, w, y_labels)
    return y_pred, loss[0, 0]


def torch_model_forward(x, w, b=None, y=None):
    """x: (B, D) f32, w: (D, C) f32 (transposed nn.Linear weight),
    b: accepted for nn.Linear API fidelity but unused (cancels in dim-0 softmax),
    y: optional (B,) / (B,1) int labels.

    Returns y_pred (B, C) if y is None, else the scalar CrossEntropyLoss."""
    del b  # per-column bias is invariant under softmax over dim=0
    B, _ = x.shape
    C = w.shape[1]

    if y is None:
        # Inference path: single kernel, returns (B, C) softmax-over-dim0 probabilities.
        # TODO(synk): for large B, switch to a two-pass batch-tiled dim-0 softmax
        # (batch axis "arbitrary" + resident (1,C) max/sum scratch, ≥512-row tiles,
        # masked padded rows, lane-dense (C,B) output layout) instead of this
        # single-shot kernel.
        return pl.pallas_call(
            linear_softmax_kernel,
            out_shape=jax.ShapeDtypeStruct((B, C), jnp.float32),
            in_specs=[
                pl.BlockSpec(memory_space=_VMEM),
                pl.BlockSpec(memory_space=_VMEM),
            ],
            out_specs=pl.BlockSpec(memory_space=_VMEM),
        )(x, w)

    # Training path: one fused launch; return only the loss (module semantics).
    return torch_model_forward_fused(x, w, y)[1]


if __name__ == "__main__":
    key = jax.random.PRNGKey(0)
    k_x, k_w, k_b, k_y = jax.random.split(key, 4)

    B = 8    # batch
    D = 32   # input_size
    C = 5    # number of classes (fixed by the module)

    x = jax.random.normal(k_x, (B, D), dtype=jnp.float32)
    # Deterministic "nn.Linear(D, 5)" parameters (PyTorch-style uniform init bounds).
    bound = 1.0 / (D ** 0.5)
    w = jax.random.uniform(k_w, (D, C), minval=-bound, maxval=bound, dtype=jnp.float32)
    b = jax.random.uniform(k_b, (C,), minval=-bound, maxval=bound, dtype=jnp.float32)
    # Pre-shape labels ONCE into the kernel-ready (B,1) int32 layout (hot-path hygiene).
    y = jax.random.randint(k_y, (B,), 0, C)
    y2 = y.astype(jnp.int32).reshape(B, 1)

    # Inference path (y=None): softmax-over-dim0 probabilities, shape (B, 5).
    y_pred_inf = torch_model_forward(x, w, b)
    jax.block_until_ready(y_pred_inf)

    # Training path: ONE fused launch producing both y_pred and the scalar loss.
    y_pred, loss = torch_model_forward_fused(x, w, y2)
    jax.block_until_ready((y_pred, loss))

    # Sanity-check against a plain-JAX reference of the same forward semantics
    # (reference INCLUDES the bias — it cancels exactly in softmax over dim=0).
    logits_ref = x @ w + b
    y_pred_ref = jax.nn.softmax(logits_ref, axis=0)
    logp_ref = jax.nn.log_softmax(y_pred_ref, axis=1)
    loss_ref = -jnp.mean(logp_ref[jnp.arange(B), y])
    assert jnp.allclose(y_pred_inf, y_pred_ref, atol=1e-5), "inference y_pred mismatch"
    assert jnp.allclose(y_pred, y_pred_ref, atol=1e-5), "fused y_pred mismatch"
    assert jnp.allclose(loss, loss_ref, atol=1e-5), "loss mismatch"

    print("KERNEL_OK")
</pallas_src>

<mosaic_0001>
module attributes {stable_mosaic.version = 11 : i64} {
  func.func @linear_softmax_kernel(%arg0: memref<8x32xf32, #tpu.memory_space<vmem>>, %arg1: memref<32x5xf32, #tpu.memory_space<vmem>>, %arg2: memref<8x5xf32, #tpu.memory_space<vmem>>) attributes {dimension_semantics = [], scalar_prefetch = 0 : i64, scratch_operands = 0 : i64, tpu.core_type = #tpu.core_type<tc>} {
    %c0 = arith.constant 0 : index
    %c0_0 = arith.constant 0 : index
    %0 = vector.load %arg0[%c0, %c0_0] : memref<8x32xf32, #tpu.memory_space<vmem>>, vector<8x32xf32>
    %c0_1 = arith.constant 0 : index
    %c0_2 = arith.constant 0 : index
    %1 = vector.load %arg1[%c0_1, %c0_2] : memref<32x5xf32, #tpu.memory_space<vmem>>, vector<32x5xf32>
    %cst = arith.constant dense<0.000000e+00> : vector<8x5xf32>
    %2 = tpu.matmul %0, %1, %cst {dimension_numbers = #tpu.dot_dimension_numbers<[1], [0], [0], [1], [0, 0, 1, 1], [], []>} : vector<8x32xf32>, vector<32x5xf32>, vector<8x5xf32> -> vector<8x5xf32>
    %cst_3 = arith.constant dense<0xFF800000> : vector<5xf32>
    %3 = vector.multi_reduction <maximumf>, %2, %cst_3 [0] : vector<8x5xf32> to vector<5xf32>
    %4 = vector.shape_cast %3 : vector<5xf32> to vector<1x5xf32>
    %5 = vector.broadcast %4 : vector<1x5xf32> to vector<8x5xf32>
    %6 = arith.subf %2, %5 : vector<8x5xf32>
    %7 = math.exp %6 : vector<8x5xf32>
    %cst_4 = arith.constant dense<0.000000e+00> : vector<5xf32>
    %8 = vector.multi_reduction <add>, %7, %cst_4 [0] : vector<8x5xf32> to vector<5xf32>
    %9 = vector.shape_cast %8 : vector<5xf32> to vector<1x5xf32>
    %10 = tpu.reciprocal %9 {approx = true} : vector<1x5xf32> -> vector<1x5xf32>
    %11 = arith.mulf %9, %10 : vector<1x5xf32>
    %cst_5 = arith.constant 2.000000e+00 : f32
    %12 = vector.broadcast %cst_5 : f32 to vector<1x5xf32>
    %13 = arith.subf %12, %11 : vector<1x5xf32>
    %14 = arith.mulf %10, %13 : vector<1x5xf32>
    %15 = vector.broadcast %14 : vector<1x5xf32> to vector<8x5xf32>
    %16 = arith.mulf %7, %15 : vector<8x5xf32>
    %c0_6 = arith.constant 0 : index
    %c0_7 = arith.constant 0 : index
    %17 = vector.load %arg2[%c0_6, %c0_7] : memref<8x5xf32, #tpu.memory_space<vmem>>, vector<8x5xf32>
    tpu.vector_store %arg2[%c0_6, %c0_7], %16 {strides = array<i32>} : memref<8x5xf32, #tpu.memory_space<vmem>>, vector<8x5xf32>,
    return
  }
}

</mosaic_0001>

<llo_original>
// kernel: tpu_custom_call.1
$region0: #{tpu_custom_call.1}
  #allocation0 [shape = 'u32[]', space=smem, size = 0x4, offset = 0x4, fixed_abs, tag = 'smem constant byte address 0x4 - core index']
  #allocation1 [shape = 'u32[144,128]{1,0:T(1,128)}', space=vmem, size = 0x12000, scoped, tag = 'internal scratch']
  %s0 = inlined_call_operand.vmem [shape: f32[8,32], index: 0, kind: input, shape index: {}]
  %s1 = inlined_call_operand.vmem [shape: f32[32,5], index: 1, kind: input, shape index: {}]
  %s2 = inlined_call_operand.hbm [shape: f32[8,5], index: 2, kind: output, shape index: {}]
  %s3 = sld [smem:[#allocation0]]
  $region18: #{tpu_custom_call.1} parent=0
    _
  %s5 = ssub.s32 1, %s3
  %s6 = scalar_select 0, %s5, %s3
  $region1: #{tpu_custom_call.1} parent=0
    #allocation2 [shape = 'u8[4096]{0}', space=vmem, size = 0x1000, scoped, tag = 'output window, operand 0, single buffered']
    #allocation3 [shape = 's32[1]{0}', space=sflag, size = 0x4, scoped, tag = 'scoped memory for tpu_custom_call.1']
    %7 = vsyncpa [#allocation3], 0
    // Predicated region
    $region2: #{tpu_custom_call.1} parent=1 // pred_check
      _
    $region3: #{tpu_custom_call.1} parent=1 // pred_check_branch
      %9 = sbr.rel (0) target = $region5
    $region4: #{tpu_custom_call.1} parent=1 // pred_region
      _
    $region5: #{tpu_custom_call.1} parent=1 // pred_fallthru
      _
    // Predicated region
    $region6: #{tpu_custom_call.1} parent=1 // pred_check
      _
    $region7: #{tpu_custom_call.1} parent=1 // pred_check_branch
      %11 = sbr.rel (0) target = $region9
    $region8: #{tpu_custom_call.1} parent=1 // pred_region
      _
    $region9: #{tpu_custom_call.1} parent=1 // pred_fallthru
      _
    %v12 = vld [vmem:[%s0] sm:$0xff]
    %v13 = vld [vmem:[%s1] sm:$0xff]
    %v14 = vld [vmem:[%s1 + $0x8] sm:$0xff]
    %v15 = vld [vmem:[%s1 + $0x10] sm:$0xff]
    %v16 = vld [vmem:[%s1 + $0x18] sm:$0xff]
    %vm17 = vcmask 261120
    %v19 = vsel %vm17, %v12, 0
    %21 = vmatprep.subr.mxu0 0.0
    %22 = vmatpush1.msra.mxu0 %v13
    %23 = vmatprep.subr.mxu0 0.0
    %24 = vmatpush1.msra.mxu0 %v14
    %25 = vmatprep.subr.mxu0 0.0
    %26 = vmatpush1.msra.mxu0 %v15
    %27 = vmatprep.subr.mxu0 0.0
    %28 = vmatpush1.msra.mxu0 %v16
    %29 = vmatprep.subr.mxu0 0.0
    %30 = vmatpush1.msra.mxu0 0.0
    %31 = vmatprep.subr.mxu0 0.0
    %32 = vmatpush1.msra.mxu0 0.0
    %33 = vmatprep.subr.mxu0 0.0
    %34 = vmatpush1.msra.mxu0 0.0
    %35 = vmatprep.subr.mxu0 0.0
    %36 = vmatpush1.msra.mxu0 0.0
    %37 = vmatprep.subr.mxu0 0.0
    %38 = vmatpush1.msra.mxu0 0.0
    %39 = vmatprep.subr.mxu0 0.0
    %40 = vmatpush1.msra.mxu0 0.0
    %41 = vmatprep.subr.mxu0 0.0
    %42 = vmatpush1.msra.mxu0 0.0
    %43 = vmatprep.subr.mxu0 0.0
    %44 = vmatpush1.msra.mxu0 0.0
    %45 = vmatprep.subr.mxu0 0.0
    %46 = vmatpush1.msra.mxu0 0.0
    %47 = vmatprep.subr.mxu0 0.0
    %48 = vmatpush1.msra.mxu0 0.0
    %49 = vmatprep.subr.mxu0 0.0
    %50 = vmatpush1.msra.mxu0 0.0
    %51 = vmatprep.subr.mxu0 0.0
    %52 = vmatpush1.msra.mxu0 0.0
    %53 = vmatprep.subr.mxu0 0.0
    %54 = vmatpush1.msra.mxu0 0.0
    %55 = vmatprep.subr.mxu0 0.0
    %56 = vmatpush1.msra.mxu0 0.0
    %57 = vmatprep.subr.mxu0 0.0
    %58 = vmatpush1.msra.mxu0 0.0
    %59 = vmatprep.subr.mxu0 0.0
    %60 = vmatpush1.msra.mxu0 0.0
    %61 = vmatprep.subr.mxu0 0.0
    %62 = vmatpush1.msra.mxu0 0.0
    %63 = vmatprep.subr.mxu0 0.0
    %64 = vmatpush1.msra.mxu0 0.0
    %65 = vmatprep.subr.mxu0 0.0
    %66 = vmatpush1.msra.mxu0 0.0
    %67 = vmatprep.subr.mxu0 0.0
    %68 = vmatpush1.msra.mxu0 0.0
    %69 = vmatprep.subr.mxu0 0.0
    %70 = vmatpush1.msra.mxu0 0.0
    %71 = vmatprep.subr.mxu0 0.0
    %72 = vmatpush1.msra.mxu0 0.0
    %73 = vmatprep.subr.mxu0 0.0
    %74 = vmatpush1.msra.mxu0 0.0
    %75 = vmatprep.subr.mxu0 0.0
    %76 = vmatpush1.msra.mxu0 0.0
    %77 = vmatprep.subr.mxu0 0.0
    %78 = vmatpush1.msra.mxu0 0.0
    %79 = vmatprep.subr.mxu0 0.0
    %80 = vmatpush1.msra.mxu0 0.0
    %81 = vmatprep.subr.mxu0 0.0
    %82 = vmatpush1.msra.mxu0 0.0
    %83 = vmatprep.subr.mxu0 0.0
    %84 = vmatpush1.msra.mxu0 0.0
    %85 = vmatprep.mubr.f32.mxu0 0.0
    %86 = vmatmul.mubr.f32.gmra.mrb[0].mxu0 %v19
    %v87 = vpop.f32.mrb[0].mxu0
    %v88 = vadd.f32 0.0, %v87
    %v89 = vpop.f32.mrb[0].mxu0
    %90 = vdwg.mxu0
    %vm91 = vcmask 39936
    %v92 = vsel %vm91, %v88, -inf
    %v93 = vrot.slane %v92, 4
    %v94 = vmax.f32 %v92, %v93
    %v95 = vrot.slane %v94, 2
    %v96 = vmax.f32 %v94, %v95
    %v97 = vrot.slane %v96, 1
    %v98 = vmax.f32 %v96, %v97
    %v99 = vsub.f32 %v88, %v98
    %v100 = vmul.f32 %v99, 1.442695
    %v101 = vpow.pop %v100
    %v102 = vsel %vm91, %v101, 0.0
    %v103 = vrot.slane %v102, 4
    %v104 = vadd.f32 %v102, %v103
    %v105 = vrot.slane %v104, 2
    %v106 = vadd.f32 %v104, %v105
    %v107 = vrot.slane %v106, 1
    %v108 = vadd.f32 %v106, %v107
    %v109 = vrcp.pop %v108
    %v110 = vmul.f32 %v108, %v109
    %v111 = vsub.f32 2.0, %v110
    %v112 = vmul.f32 %v109, %v111
    %v113 = vmul.f32 %v101, %v112
    %114 = vst.msk [vmem:[#allocation2] sm:$0xff] %vm91, %v113
    // Predicated region
    $region10: #{tpu_custom_call.1} parent=1 // pred_check
      _
    $region11: #{tpu_custom_call.1} parent=1 // pred_check_branch
      %116 = sbr.rel (0) target = $region13
    $region12: #{tpu_custom_call.1} parent=1 // pred_region
      %s118 = ssub.s32 128, 128
      %119 = vsyncadd [#allocation3], %s118
      %s121 = sshll.u32 [#allocation2], 4
      %s122 = int_to_ptr.vmem [resolvable:$true] %s121
      %124 = dma.vmem_to_hbm [thread:$0]  %s122, 128, %s2, [#allocation3]
    $region13: #{tpu_custom_call.1} parent=1 // pred_fallthru
      _
    // Predicated region
    $region14: #{tpu_custom_call.1} parent=1 // pred_check
      _
    $region15: #{tpu_custom_call.1} parent=1 // pred_check_branch
      %126 = sbr.rel (0) target = $region17
    $region16: #{tpu_custom_call.1} parent=1 // pred_region
      %127 = dma.done [#allocation3], 128
    $region17: #{tpu_custom_call.1} parent=1 // pred_fallthru
      _
    %128 = vsyncpa [#allocation3], 1

</llo_original>
